<compile_context>
chip_gen: v6e
topology: v6e:2x2x1
jax: 0.10.0
libtpu: 0.0.40
codegen_flags: <defaults>
</compile_context>

<pallas_src>
import jax
import jax.numpy as jnp
from jax.experimental import pallas as pl
from jax.experimental.pallas import tpu as pltpu


def _affine_kernel(a_ref, b_ref, x_ref, o_ref):
    # a_ref / b_ref: (1,) scalars in SMEM; x_ref / o_ref: (tile_m, tile_n) VMEM tiles.
    a = a_ref[0]
    b = b_ref[0]
    o_ref[...] = a * x_ref[...] + b


def _choose_tiles(total_elems, itemsize, target_block_bytes=2 * 1024 * 1024):
    """Pick a lane-dense (tile_m, tile_n) giving ~target_block_bytes blocks."""
    # Last dim: a multiple of 128, up to 1024 wide (wide unmasked vst), but
    # shrink for tiny inputs so we don't pad excessively.
    tile_n = 1024
    while tile_n > 128 and total_elems < tile_n * 8:
        tile_n //= 2
    rows_total = pl.cdiv(total_elems, tile_n)
    # Rows per block: multiple of 8, sized so one block ~= target_block_bytes,
    # but never more rows than the (8-rounded) input actually has.
    target_rows = max(8, (target_block_bytes // (tile_n * itemsize)) // 8 * 8)
    rows_rounded = ((rows_total + 7) // 8) * 8
    tile_m = int(min(target_rows, rows_rounded))
    return tile_m, tile_n


def regressor_forward(x, a, b, *, target_block_bytes=2 * 1024 * 1024):
    """y = a * x + b, elementwise, computed in a Pallas TPU kernel.

    x: any shape / float dtype.  a, b: shape-(1,) parameters (as in the
    PyTorch module: nn.Parameter(torch.ones(1) * c)).
    """
    orig_shape = x.shape
    dtype = x.dtype
    itemsize = jnp.dtype(dtype).itemsize
    total = x.size

    a = a.astype(dtype)
    b = b.astype(dtype)

    tile_m, tile_n = _choose_tiles(total, itemsize, target_block_bytes)

    # Flatten to a lane-dense 2-D slab, padding up to a whole number of blocks.
    rows_total = pl.cdiv(total, tile_n)
    rows_padded = pl.cdiv(rows_total, tile_m) * tile_m
    padded_total = rows_padded * tile_n
    flat = x.reshape(-1)
    if padded_total != total:
        flat = jnp.pad(flat, (0, padded_total - total))
    x2d = flat.reshape(rows_padded, tile_n)

    grid = (rows_padded // tile_m,)

    cost = pl.CostEstimate(
        flops=2 * padded_total,
        transcendentals=0,
        bytes_accessed=2 * padded_total * itemsize,
    )

    y2d = pl.pallas_call(
        _affine_kernel,
        out_shape=jax.ShapeDtypeStruct((rows_padded, tile_n), dtype),
        grid=grid,
        in_specs=[
            pl.BlockSpec(memory_space=pltpu.SMEM),                    # a (scalar)
            pl.BlockSpec(memory_space=pltpu.SMEM),                    # b (scalar)
            pl.BlockSpec((tile_m, tile_n), lambda i: (i, 0)),         # x tile
        ],
        out_specs=pl.BlockSpec((tile_m, tile_n), lambda i: (i, 0)),   # y tile
        compiler_params=pltpu.CompilerParams(
            dimension_semantics=("parallel",),
            vmem_limit_bytes=32 * 1024 * 1024,
        ),
        cost_estimate=cost,
    )(a, b, x2d)

    # Strip padding and restore the original shape (free layout plumbing).
    return y2d.reshape(-1)[:total].reshape(orig_shape)


if __name__ == "__main__":
    # Deterministic parameter init matching Regressor.__init__:
    #   a = ones(1) * 1.3, b = ones(1) * 0.8
    a = jnp.ones((1,), dtype=jnp.float32) * 1.3
    b = jnp.ones((1,), dtype=jnp.float32) * 0.8

    key = jax.random.PRNGKey(0)

    # Small, nicely shaped input.
    x1 = jax.random.normal(key, (8, 128), dtype=jnp.float32)
    y1 = jax.block_until_ready(regressor_forward(x1, a, b))
    assert jnp.allclose(y1, a * x1 + b, atol=1e-6), "mismatch vs reference (x1)"

    # Awkward shape (exercises flatten + pad + tail-strip path).
    x2 = jax.random.normal(jax.random.PRNGKey(1), (3, 7, 11), dtype=jnp.float32)
    y2 = jax.block_until_ready(regressor_forward(x2, a, b))
    assert jnp.allclose(y2, a * x2 + b, atol=1e-6), "mismatch vs reference (x2)"

    print("KERNEL_OK")
</pallas_src>

<mosaic_0001>
module attributes {stable_mosaic.version = 11 : i64} {
  func.func @_affine_kernel(%arg0: i32, %arg1: memref<1xf32, #tpu.memory_space<smem>>, %arg2: memref<1xf32, #tpu.memory_space<smem>>, %arg3: memref<8x128xf32, #tpu.memory_space<vmem>>, %arg4: memref<8x128xf32, #tpu.memory_space<vmem>>) attributes {dimension_semantics = [#tpu.dimension_semantics<parallel>], iteration_bounds = array<i64: 1>, scalar_prefetch = 0 : i64, scratch_operands = 0 : i64, tpu.core_type = #tpu.core_type<tc>, window_params = [{transform_indices = @transform_0, window_bounds = array<i64: 1>}, {transform_indices = @transform_1, window_bounds = array<i64: 1>}, {transform_indices = @transform_2, window_bounds = array<i64: 8, 128>}, {transform_indices = @transform_3, window_bounds = array<i64: 8, 128>}]} {
    %c0 = arith.constant 0 : index
    %0 = memref.load %arg1[%c0] : memref<1xf32, #tpu.memory_space<smem>>
    %c0_0 = arith.constant 0 : index
    %1 = memref.load %arg2[%c0_0] : memref<1xf32, #tpu.memory_space<smem>>
    %c0_1 = arith.constant 0 : index
    %c0_2 = arith.constant 0 : index
    %2 = vector.load %arg3[%c0_1, %c0_2] : memref<8x128xf32, #tpu.memory_space<vmem>>, vector<8x128xf32>
    %3 = vector.broadcast %0 : f32 to vector<8x128xf32>
    %4 = arith.mulf %3, %2 : vector<8x128xf32>
    %5 = vector.broadcast %1 : f32 to vector<8x128xf32>
    %6 = arith.addf %4, %5 : vector<8x128xf32>
    %c0_3 = arith.constant 0 : index
    %c0_4 = arith.constant 0 : index
    %7 = vector.load %arg4[%c0_3, %c0_4] : memref<8x128xf32, #tpu.memory_space<vmem>>, vector<8x128xf32>
    tpu.vector_store %arg4[%c0_3, %c0_4], %6 {strides = array<i32>} : memref<8x128xf32, #tpu.memory_space<vmem>>, vector<8x128xf32>,
    return
  }
  func.func @transform_0(%arg0: i32) -> i32 {
    %c0_i32 = arith.constant 0 : i32
    %c0_i32_0 = arith.constant 0 : i32
    return %c0_i32 : i32
  }
  func.func @transform_1(%arg0: i32) -> i32 {
    %c0_i32 = arith.constant 0 : i32
    %c0_i32_0 = arith.constant 0 : i32
    return %c0_i32 : i32
  }
  func.func @transform_2(%arg0: i32) -> (i32, i32) {
    %c0_i32 = arith.constant 0 : i32
    %c0_i32_0 = arith.constant 0 : i32
    return %arg0, %c0_i32 : i32, i32
  }
  func.func @transform_3(%arg0: i32) -> (i32, i32) {
    %c0_i32 = arith.constant 0 : i32
    %c0_i32_0 = arith.constant 0 : i32
    return %arg0, %c0_i32 : i32, i32
  }
}

</mosaic_0001>

<llo_original>
// kernel: tpu_custom_call.1
$region0: #{tpu_custom_call.1}
  #allocation0 [shape = 'u32[]', space=smem, size = 0x4, offset = 0x4, fixed_abs, tag = 'smem constant byte address 0x4 - core index']
  #allocation1 [shape = 'u32[144,128]{1,0:T(1,128)}', space=vmem, size = 0x12000, scoped, tag = 'internal scratch']
  #allocation2 [shape = 'f32[1]{0:T(128)S(6)}', space=smem, size = 0x200, scoped, tag = 'scoped memory for tpu_custom_call.1']
  #allocation3 [shape = 'f32[1]{0:T(128)S(6)}', space=smem, size = 0x200, scoped, tag = 'scoped memory for tpu_custom_call.1']
  %s0 = inlined_call_operand.<no memory space> [shape: f32[1], index: 0, kind: input, shape index: {}]
  %s1 = inlined_call_operand.<no memory space> [shape: f32[1], index: 1, kind: input, shape index: {}]
  %s2 = inlined_call_operand.hbm [shape: f32[8,128], index: 2, kind: input, shape index: {}]
  %s3 = inlined_call_operand.hbm [shape: f32[8,128], index: 3, kind: output, shape index: {}]
  %s4 = sld [smem:[#allocation0]]
  $region26: #{tpu_custom_call.1} parent=0
    _
  %s6 = ssub.s32 1, %s4
  %s7 = scalar_select 0, %s6, %s4
  %8 = sst [smem:[#allocation2]] %s0
  %9 = sst [smem:[#allocation3]] %s1
  $region1: #{tpu_custom_call.1} parent=0
    #allocation4 [shape = 'u8[4096]{0}', space=vmem, size = 0x1000, scoped, tag = 'input window, operand 2, single buffered']
    #allocation5 [shape = 's32[1]{0}', space=sflag, size = 0x4, scoped, tag = 'scoped memory for tpu_custom_call.1']
    #allocation6 [shape = 's32[1]{0}', space=sflag, size = 0x4, scoped, tag = 'scoped memory for tpu_custom_call.1']
    #allocation7 [shape = 'u8[4096]{0}', space=vmem, size = 0x1000, scoped, tag = 'output window, operand 0, single buffered']
    %10 = vsyncpa [#allocation5], 0
    %11 = vsyncpa [#allocation6], 0
    // Predicated region
    $region2: #{tpu_custom_call.1} parent=1 // pred_check
      _
    $region3: #{tpu_custom_call.1} parent=1 // pred_check_branch
      %13 = sbr.rel (0) target = $region5
    $region4: #{tpu_custom_call.1} parent=1 // pred_region
      _
    $region5: #{tpu_custom_call.1} parent=1 // pred_fallthru
      _
    // Predicated region
    $region6: #{tpu_custom_call.1} parent=1 // pred_check
      _
    $region7: #{tpu_custom_call.1} parent=1 // pred_check_branch
      %15 = sbr.rel (0) target = $region9
    $region8: #{tpu_custom_call.1} parent=1 // pred_region
      _
    $region9: #{tpu_custom_call.1} parent=1 // pred_fallthru
      _
    // Predicated region
    $region10: #{tpu_custom_call.1} parent=1 // pred_check
      _
    $region11: #{tpu_custom_call.1} parent=1 // pred_check_branch
      %17 = sbr.rel (0) target = $region13
    $region12: #{tpu_custom_call.1} parent=1 // pred_region
      %s19 = ssub.s32 128, 128
      %20 = vsyncadd [#allocation5], %s19
      %s22 = sshll.u32 [#allocation4], 4
      %s23 = int_to_ptr.vmem [resolvable:$true] %s22
      %25 = dma.hbm_to_vmem [thread:$0]  %s2, 128, %s23, [#allocation5]
    $region13: #{tpu_custom_call.1} parent=1 // pred_fallthru
      _
    // Predicated region
    $region14: #{tpu_custom_call.1} parent=1 // pred_check
      _
    $region15: #{tpu_custom_call.1} parent=1 // pred_check_branch
      %27 = sbr.rel (0) target = $region17
    $region16: #{tpu_custom_call.1} parent=1 // pred_region
      %28 = dma.done [#allocation5], 128
    $region17: #{tpu_custom_call.1} parent=1 // pred_fallthru
      _
    %s29 = sld [smem:[#allocation2]]
    %s30 = sld [smem:[#allocation3]]
    %v31 = vld [vmem:[#allocation4] sm:$0xff]
    %v32 = vstv %s29
    %v33 = vmul.f32 %v32, %v31
    %v34 = vstv %s30
    %v35 = vadd.f32 %v33, %v34
    %36 = vst [vmem:[#allocation7] sm:$0xff] %v35
    // Predicated region
    $region18: #{tpu_custom_call.1} parent=1 // pred_check
      _
    $region19: #{tpu_custom_call.1} parent=1 // pred_check_branch
      %38 = sbr.rel (0) target = $region21
    $region20: #{tpu_custom_call.1} parent=1 // pred_region
      %s40 = ssub.s32 128, 128
      %41 = vsyncadd [#allocation6], %s40
      %s43 = sshll.u32 [#allocation7], 4
      %s44 = int_to_ptr.vmem [resolvable:$true] %s43
      %46 = dma.vmem_to_hbm [thread:$0]  %s44, 128, %s3, [#allocation6]
    $region21: #{tpu_custom_call.1} parent=1 // pred_fallthru
      _
    // Predicated region
    $region22: #{tpu_custom_call.1} parent=1 // pred_check
      _
    $region23: #{tpu_custom_call.1} parent=1 // pred_check_branch
      %48 = sbr.rel (0) target = $region25
    $region24: #{tpu_custom_call.1} parent=1 // pred_region
      %49 = dma.done [#allocation6], 128
    $region25: #{tpu_custom_call.1} parent=1 // pred_fallthru
      _
    %50 = vsyncpa [#allocation5], 1
    %51 = vsyncpa [#allocation6], 1

</llo_original>
